<compile_context>
chip_gen: v5e
topology: v5e:2x2
jax: 0.10.0
libtpu: 0.0.40
codegen_flags: <defaults>
</compile_context>

<pallas_src>
import functools

import jax
import jax.numpy as jnp
from jax import lax
from jax.experimental import pallas as pl
from jax.experimental.pallas import tpu as pltpu

BN_EPS = 1e-5


def _round_up(a, b):
    return (a + b - 1) // b * b


def _shift_lanes(v, off):
    """Returns w with w[:, p] = v[:, p + off], zero-filled outside the range."""
    if off == 0:
        return v
    c = v.shape[0]
    z = jnp.zeros((c, abs(off)), v.dtype)
    if off > 0:
        return jnp.concatenate([v[:, off:], z], axis=1)
    return jnp.concatenate([z, v[:, :off]], axis=1)


def conv_block_kernel(x_ref, w1_ref, w2_ref, mask_ref, sel_ref, o_ref, *,
                      Wp, n_valid, pool_type):
    mask = mask_ref[...]                     # (1, Ppad), 1.0 on interior pixels
    inv_cnt = 1.0 / n_valid

    def conv_bn_relu(src, w):
        # src: (C, Ppad) with zeros outside the interior (= conv zero padding).
        # Single im2col matmul: (Cout, 9C) @ (9C, Ppad) -> (Cout, Ppad).
        cols = [_shift_lanes(src, (ky - 1) * Wp + (kx - 1))
                for ky in range(3) for kx in range(3)]
        im = jnp.concatenate(cols, axis=0)
        z = jnp.dot(w, im, preferred_element_type=jnp.float32)
        # Single-pass BatchNorm (train-mode batch stats over N*H*W, biased
        # variance, gamma=1, beta=0) restricted to interior pixels.
        zm = z * mask
        s1 = jnp.sum(zm, axis=1, keepdims=True)
        s2 = jnp.sum(zm * zm, axis=1, keepdims=True)
        mean = s1 * inv_cnt
        var = s2 * inv_cnt - mean * mean
        zn = (z - mean) * lax.rsqrt(var + BN_EPS)
        # ReLU; re-zero border/tail so it acts as the next conv's zero padding.
        return jnp.maximum(zn, 0.0) * mask

    y = conv_bn_relu(x_ref[...], w1_ref[...])
    y = conv_bn_relu(y, w2_ref[...])

    # 2x2 pooling, fully lane-dense: after two shift+combine steps the value at
    # padded pixel p holds the combine over {p, p+1, p+Wp, p+Wp+1}.
    y_down = _shift_lanes(y, Wp)
    if pool_type == 'avg':
        h = y + y_down
        agg = 0.25 * (h + _shift_lanes(h, 1))
    elif pool_type == 'max':
        h = jnp.maximum(y, y_down)
        agg = jnp.maximum(h, _shift_lanes(h, 1))
    elif pool_type == 'avg+max':
        ha = y + y_down                       # one pass over y for both combines
        hm = jnp.maximum(y, y_down)
        agg = (0.25 * (ha + _shift_lanes(ha, 1))
               + jnp.maximum(hm, _shift_lanes(hm, 1)))
    else:
        raise Exception('Incorrect argument!')

    # Gather the 2x2 window anchors into a lane-dense (Cout, N*Ho*Wo) output
    # with a one-hot selection matmul (exact; no strided sublane reads).
    o_ref[...] = jnp.dot(agg, sel_ref[...], preferred_element_type=jnp.float32)


def conv_block(x_nchw, w1_hwio, w2_hwio, pool_size=(2, 2), pool_type='avg'):
    assert pool_size == (2, 2)
    N, Cin, H, W = x_nchw.shape
    Cout = w1_hwio.shape[-1]
    Ho, Wo = H // 2, W // 2
    Hp, Wp = H + 2, W + 2
    P = N * Hp * Wp
    Ppad = _round_up(P, 128)          # lane-aligned flattened padded grid
    Nout = N * Ho * Wo
    Cin_p = _round_up(Cin, 8)         # sublane-aligned channel blocks for im2col

    # channel-major, spatially zero-padded, flattened, tail-padded to Ppad lanes
    x = x_nchw.astype(jnp.float32)
    x = jnp.pad(x, ((0, 0), (0, Cin_p - Cin), (1, 1), (1, 1)))
    x_cm = jnp.transpose(x, (1, 0, 2, 3)).reshape(Cin_p, P)
    x_cm = jnp.pad(x_cm, ((0, 0), (0, Ppad - P)))

    def weight_matrix(w_hwio, cin, cin_p):
        w = jnp.pad(w_hwio.astype(jnp.float32),
                    ((0, 0), (0, 0), (0, cin_p - cin), (0, 0)))
        # (3,3,cin_p,Cout) -> (Cout, 9*cin_p); column = (ky*3+kx)*cin_p + ci
        return jnp.transpose(w, (3, 0, 1, 2)).reshape(Cout, 9 * cin_p)

    w1m = weight_matrix(w1_hwio, Cin, Cin_p)
    w2m = weight_matrix(w2_hwio, Cout, Cout)

    # interior-pixel mask over the flattened padded grid
    p = jnp.arange(Ppad)
    rem = p % (Hp * Wp)
    yy, xx = rem // Wp, rem % Wp
    mask = ((p < P) & (yy >= 1) & (yy <= H) & (xx >= 1) & (xx <= W))
    mask = mask.astype(jnp.float32).reshape(1, Ppad)

    # one-hot selection matrix: column q picks the anchor pixel of pool window q
    q = jnp.arange(Nout)
    n, j, i = q // (Ho * Wo), (q // Wo) % Ho, q % Wo
    anchor = n * (Hp * Wp) + (2 * j + 1) * Wp + (2 * i + 1)
    sel = (jnp.arange(Ppad)[:, None] == anchor[None, :]).astype(jnp.float32)

    kernel = functools.partial(conv_block_kernel, Wp=Wp,
                               n_valid=float(N * H * W), pool_type=pool_type)
    out_cm = pl.pallas_call(
        kernel,
        out_shape=jax.ShapeDtypeStruct((Cout, Nout), jnp.float32),
        in_specs=[pl.BlockSpec(memory_space=pltpu.MemorySpace.VMEM)] * 5,
        out_specs=pl.BlockSpec(memory_space=pltpu.MemorySpace.VMEM),
        compiler_params=pltpu.CompilerParams(vmem_limit_bytes=32 * 1024 * 1024),
    )(x_cm, w1m, w2m, mask, sel)

    # (Cout, N*Ho*Wo) -> (N, Cout, Ho, Wo)
    return jnp.transpose(out_cm.reshape(Cout, N, Ho, Wo), (1, 0, 2, 3))


def xavier_uniform(key, shape_hwio):
    kh, kw, cin, cout = shape_hwio
    fan_in, fan_out = cin * kh * kw, cout * kh * kw
    bound = (6.0 / (fan_in + fan_out)) ** 0.5
    return jax.random.uniform(key, shape_hwio, jnp.float32, -bound, bound)


def reference_forward(x_nchw, w1_hwio, w2_hwio, pool_type='avg'):
    """Pure-JAX reference mirroring the PyTorch forward (train-mode BN)."""
    x = jnp.transpose(x_nchw, (0, 2, 3, 1)).astype(jnp.float32)
    dn = ('NHWC', 'HWIO', 'NHWC')

    def conv(a, w):
        return lax.conv_general_dilated(a, w, (1, 1), ((1, 1), (1, 1)),
                                        dimension_numbers=dn)

    def bn_relu(z):
        m = z.mean(axis=(0, 1, 2), keepdims=True)
        v = ((z - m) ** 2).mean(axis=(0, 1, 2), keepdims=True)
        return jnp.maximum((z - m) * lax.rsqrt(v + BN_EPS), 0.0)

    z = bn_relu(conv(x, w1_hwio))
    z = bn_relu(conv(z, w2_hwio))
    N, H, W, C = z.shape
    zr = z.reshape(N, H // 2, 2, W // 2, 2, C)
    avg, mx = zr.mean(axis=(2, 4)), zr.max(axis=(2, 4))
    out = {'avg': avg, 'max': mx, 'avg+max': avg + mx}[pool_type]
    return jnp.transpose(out, (0, 3, 1, 2))


if __name__ == "__main__":
    key = jax.random.PRNGKey(0)
    kx, k1, k2 = jax.random.split(key, 3)

    N, Cin, H, W = 2, 4, 16, 16       # input NCHW (PyTorch convention)
    Cout = 8                          # out_channels

    x = jax.random.normal(kx, (N, Cin, H, W), jnp.float32)
    w1 = xavier_uniform(k1, (3, 3, Cin, Cout))     # conv1 weight (HWIO)
    w2 = xavier_uniform(k2, (3, 3, Cout, Cout))    # conv2 weight (HWIO)

    for pool_type in ('avg', 'max', 'avg+max'):
        out = jax.block_until_ready(conv_block(x, w1, w2, (2, 2), pool_type))
        ref = reference_forward(x, w1, w2, pool_type)
        assert out.shape == (N, Cout, H // 2, W // 2), out.shape
        err = float(jnp.max(jnp.abs(out - ref)))
        assert jnp.allclose(out, ref, atol=1e-3, rtol=1e-3), (pool_type, err)

    print("KERNEL_OK")
</pallas_src>

<mosaic_0001>
module attributes {stable_mosaic.version = 11 : i64} {
  func.func @conv_block_kernel(%arg0: memref<8x768xf32, #tpu.memory_space<vmem>>, %arg1: memref<8x72xf32, #tpu.memory_space<vmem>>, %arg2: memref<8x72xf32, #tpu.memory_space<vmem>>, %arg3: memref<1x768xf32, #tpu.memory_space<vmem>>, %arg4: memref<768x128xf32, #tpu.memory_space<vmem>>, %arg5: memref<8x128xf32, #tpu.memory_space<vmem>>) attributes {dimension_semantics = [], scalar_prefetch = 0 : i64, scratch_operands = 0 : i64, tpu.core_type = #tpu.core_type<tc>} {
    %c0 = arith.constant 0 : index
    %c0_0 = arith.constant 0 : index
    %0 = vector.load %arg3[%c0, %c0_0] : memref<1x768xf32, #tpu.memory_space<vmem>>, vector<1x768xf32>
    %c0_1 = arith.constant 0 : index
    %c0_2 = arith.constant 0 : index
    %1 = vector.load %arg0[%c0_1, %c0_2] : memref<8x768xf32, #tpu.memory_space<vmem>>, vector<8x768xf32>
    %c0_3 = arith.constant 0 : index
    %c0_4 = arith.constant 0 : index
    %2 = vector.load %arg1[%c0_3, %c0_4] : memref<8x72xf32, #tpu.memory_space<vmem>>, vector<8x72xf32>
    %cst = arith.constant 0.000000e+00 : f32
    %3 = vector.broadcast %cst : f32 to vector<8x19xf32>
    %4 = vector.extract_strided_slice %1 {offsets = [0, 0], sizes = [8, 749], strides = [1, 1]} : vector<8x768xf32> to vector<8x749xf32>
    %5 = tpu.concatenate %3, %4 in 1 : vector<8x19xf32>, vector<8x749xf32> -> vector<8x768xf32>
    %cst_5 = arith.constant 0.000000e+00 : f32
    %6 = vector.broadcast %cst_5 : f32 to vector<8x18xf32>
    %7 = vector.extract_strided_slice %1 {offsets = [0, 0], sizes = [8, 750], strides = [1, 1]} : vector<8x768xf32> to vector<8x750xf32>
    %8 = tpu.concatenate %6, %7 in 1 : vector<8x18xf32>, vector<8x750xf32> -> vector<8x768xf32>
    %cst_6 = arith.constant 0.000000e+00 : f32
    %9 = vector.broadcast %cst_6 : f32 to vector<8x17xf32>
    %10 = vector.extract_strided_slice %1 {offsets = [0, 0], sizes = [8, 751], strides = [1, 1]} : vector<8x768xf32> to vector<8x751xf32>
    %11 = tpu.concatenate %9, %10 in 1 : vector<8x17xf32>, vector<8x751xf32> -> vector<8x768xf32>
    %cst_7 = arith.constant 0.000000e+00 : f32
    %12 = vector.broadcast %cst_7 : f32 to vector<8x1xf32>
    %13 = vector.extract_strided_slice %1 {offsets = [0, 0], sizes = [8, 767], strides = [1, 1]} : vector<8x768xf32> to vector<8x767xf32>
    %14 = tpu.concatenate %12, %13 in 1 : vector<8x1xf32>, vector<8x767xf32> -> vector<8x768xf32>
    %cst_8 = arith.constant 0.000000e+00 : f32
    %15 = vector.broadcast %cst_8 : f32 to vector<8x1xf32>
    %16 = vector.extract_strided_slice %1 {offsets = [0, 1], sizes = [8, 767], strides = [1, 1]} : vector<8x768xf32> to vector<8x767xf32>
    %17 = tpu.concatenate %16, %15 in 1 : vector<8x767xf32>, vector<8x1xf32> -> vector<8x768xf32>
    %cst_9 = arith.constant 0.000000e+00 : f32
    %18 = vector.broadcast %cst_9 : f32 to vector<8x17xf32>
    %19 = vector.extract_strided_slice %1 {offsets = [0, 17], sizes = [8, 751], strides = [1, 1]} : vector<8x768xf32> to vector<8x751xf32>
    %20 = tpu.concatenate %19, %18 in 1 : vector<8x751xf32>, vector<8x17xf32> -> vector<8x768xf32>
    %cst_10 = arith.constant 0.000000e+00 : f32
    %21 = vector.broadcast %cst_10 : f32 to vector<8x18xf32>
    %22 = vector.extract_strided_slice %1 {offsets = [0, 18], sizes = [8, 750], strides = [1, 1]} : vector<8x768xf32> to vector<8x750xf32>
    %23 = tpu.concatenate %22, %21 in 1 : vector<8x750xf32>, vector<8x18xf32> -> vector<8x768xf32>
    %cst_11 = arith.constant 0.000000e+00 : f32
    %24 = vector.broadcast %cst_11 : f32 to vector<8x19xf32>
    %25 = vector.extract_strided_slice %1 {offsets = [0, 19], sizes = [8, 749], strides = [1, 1]} : vector<8x768xf32> to vector<8x749xf32>
    %26 = tpu.concatenate %25, %24 in 1 : vector<8x749xf32>, vector<8x19xf32> -> vector<8x768xf32>
    %27 = tpu.concatenate %5, %8, %11, %14, %1, %17, %20, %23, %26 in 0 : vector<8x768xf32>, vector<8x768xf32>, vector<8x768xf32>, vector<8x768xf32>, vector<8x768xf32>, vector<8x768xf32>, vector<8x768xf32>, vector<8x768xf32>, vector<8x768xf32> -> vector<72x768xf32>
    %cst_12 = arith.constant dense<0.000000e+00> : vector<8x768xf32>
    %28 = tpu.matmul %2, %27, %cst_12 {dimension_numbers = #tpu.dot_dimension_numbers<[1], [0], [0], [1], [0, 0, 1, 1], [], []>} : vector<8x72xf32>, vector<72x768xf32>, vector<8x768xf32> -> vector<8x768xf32>
    %29 = vector.broadcast %0 : vector<1x768xf32> to vector<8x768xf32>
    %30 = arith.mulf %28, %29 : vector<8x768xf32>
    %cst_13 = arith.constant dense<0.000000e+00> : vector<8xf32>
    %31 = vector.multi_reduction <add>, %30, %cst_13 [1] : vector<8x768xf32> to vector<8xf32>
    %32 = vector.shape_cast %31 : vector<8xf32> to vector<8x1xf32>
    %33 = arith.mulf %30, %30 : vector<8x768xf32>
    %cst_14 = arith.constant dense<0.000000e+00> : vector<8xf32>
    %34 = vector.multi_reduction <add>, %33, %cst_14 [1] : vector<8x768xf32> to vector<8xf32>
    %35 = vector.shape_cast %34 : vector<8xf32> to vector<8x1xf32>
    %cst_15 = arith.constant 0.001953125 : f32
    %36 = vector.broadcast %cst_15 : f32 to vector<8x1xf32>
    %37 = arith.mulf %32, %36 : vector<8x1xf32>
    %cst_16 = arith.constant 0.001953125 : f32
    %38 = vector.broadcast %cst_16 : f32 to vector<8x1xf32>
    %39 = arith.mulf %35, %38 : vector<8x1xf32>
    %40 = arith.mulf %37, %37 : vector<8x1xf32>
    %41 = arith.subf %39, %40 : vector<8x1xf32>
    %42 = vector.broadcast %37 : vector<8x1xf32> to vector<8x768xf32>
    %43 = arith.subf %28, %42 : vector<8x768xf32>
    %cst_17 = arith.constant 9.99999974E-6 : f32
    %44 = vector.broadcast %cst_17 : f32 to vector<8x1xf32>
    %45 = arith.addf %41, %44 : vector<8x1xf32>
    %46 = math.rsqrt %45 : vector<8x1xf32>
    %47 = vector.broadcast %46 : vector<8x1xf32> to vector<8x768xf32>
    %48 = arith.mulf %43, %47 : vector<8x768xf32>
    %cst_18 = arith.constant 0.000000e+00 : f32
    %49 = vector.broadcast %cst_18 : f32 to vector<8x768xf32>
    %50 = arith.maximumf %48, %49 : vector<8x768xf32>
    %51 = vector.broadcast %0 : vector<1x768xf32> to vector<8x768xf32>
    %52 = arith.mulf %50, %51 : vector<8x768xf32>
    %c0_19 = arith.constant 0 : index
    %c0_20 = arith.constant 0 : index
    %53 = vector.load %arg2[%c0_19, %c0_20] : memref<8x72xf32, #tpu.memory_space<vmem>>, vector<8x72xf32>
    %cst_21 = arith.constant 0.000000e+00 : f32
    %54 = vector.broadcast %cst_21 : f32 to vector<8x19xf32>
    %55 = vector.extract_strided_slice %52 {offsets = [0, 0], sizes = [8, 749], strides = [1, 1]} : vector<8x768xf32> to vector<8x749xf32>
    %56 = tpu.concatenate %54, %55 in 1 : vector<8x19xf32>, vector<8x749xf32> -> vector<8x768xf32>
    %cst_22 = arith.constant 0.000000e+00 : f32
    %57 = vector.broadcast %cst_22 : f32 to vector<8x18xf32>
    %58 = vector.extract_strided_slice %52 {offsets = [0, 0], sizes = [8, 750], strides = [1, 1]} : vector<8x768xf32> to vector<8x750xf32>
    %59 = tpu.concatenate %57, %58 in 1 : vector<8x18xf32>, vector<8x750xf32> -> vector<8x768xf32>
    %cst_23 = arith.constant 0.000000e+00 : f32
    %60 = vector.broadcast %cst_23 : f32 to vector<8x17xf32>
    %61 = vector.extract_strided_slice %52 {offsets = [0, 0], sizes = [8, 751], strides = [1, 1]} : vector<8x768xf32> to vector<8x751xf32>
    %62 = tpu.concatenate %60, %61 in 1 : vector<8x17xf32>, vector<8x751xf32> -> vector<8x768xf32>
    %cst_24 = arith.constant 0.000000e+00 : f32
    %63 = vector.broadcast %cst_24 : f32 to vector<8x1xf32>
    %64 = vector.extract_strided_slice %52 {offsets = [0, 0], sizes = [8, 767], strides = [1, 1]} : vector<8x768xf32> to vector<8x767xf32>
    %65 = tpu.concatenate %63, %64 in 1 : vector<8x1xf32>, vector<8x767xf32> -> vector<8x768xf32>
    %cst_25 = arith.constant 0.000000e+00 : f32
    %66 = vector.broadcast %cst_25 : f32 to vector<8x1xf32>
    %67 = vector.extract_strided_slice %52 {offsets = [0, 1], sizes = [8, 767], strides = [1, 1]} : vector<8x768xf32> to vector<8x767xf32>
    %68 = tpu.concatenate %67, %66 in 1 : vector<8x767xf32>, vector<8x1xf32> -> vector<8x768xf32>
    %cst_26 = arith.constant 0.000000e+00 : f32
    %69 = vector.broadcast %cst_26 : f32 to vector<8x17xf32>
    %70 = vector.extract_strided_slice %52 {offsets = [0, 17], sizes = [8, 751], strides = [1, 1]} : vector<8x768xf32> to vector<8x751xf32>
    %71 = tpu.concatenate %70, %69 in 1 : vector<8x751xf32>, vector<8x17xf32> -> vector<8x768xf32>
    %cst_27 = arith.constant 0.000000e+00 : f32
    %72 = vector.broadcast %cst_27 : f32 to vector<8x18xf32>
    %73 = vector.extract_strided_slice %52 {offsets = [0, 18], sizes = [8, 750], strides = [1, 1]} : vector<8x768xf32> to vector<8x750xf32>
    %74 = tpu.concatenate %73, %72 in 1 : vector<8x750xf32>, vector<8x18xf32> -> vector<8x768xf32>
    %cst_28 = arith.constant 0.000000e+00 : f32
    %75 = vector.broadcast %cst_28 : f32 to vector<8x19xf32>
    %76 = vector.extract_strided_slice %52 {offsets = [0, 19], sizes = [8, 749], strides = [1, 1]} : vector<8x768xf32> to vector<8x749xf32>
    %77 = tpu.concatenate %76, %75 in 1 : vector<8x749xf32>, vector<8x19xf32> -> vector<8x768xf32>
    %78 = tpu.concatenate %56, %59, %62, %65, %52, %68, %71, %74, %77 in 0 : vector<8x768xf32>, vector<8x768xf32>, vector<8x768xf32>, vector<8x768xf32>, vector<8x768xf32>, vector<8x768xf32>, vector<8x768xf32>, vector<8x768xf32>, vector<8x768xf32> -> vector<72x768xf32>
    %cst_29 = arith.constant dense<0.000000e+00> : vector<8x768xf32>
    %79 = tpu.matmul %53, %78, %cst_29 {dimension_numbers = #tpu.dot_dimension_numbers<[1], [0], [0], [1], [0, 0, 1, 1], [], []>} : vector<8x72xf32>, vector<72x768xf32>, vector<8x768xf32> -> vector<8x768xf32>
    %80 = vector.broadcast %0 : vector<1x768xf32> to vector<8x768xf32>
    %81 = arith.mulf %79, %80 : vector<8x768xf32>
    %cst_30 = arith.constant dense<0.000000e+00> : vector<8xf32>
    %82 = vector.multi_reduction <add>, %81, %cst_30 [1] : vector<8x768xf32> to vector<8xf32>
    %83 = vector.shape_cast %82 : vector<8xf32> to vector<8x1xf32>
    %84 = arith.mulf %81, %81 : vector<8x768xf32>
    %cst_31 = arith.constant dense<0.000000e+00> : vector<8xf32>
    %85 = vector.multi_reduction <add>, %84, %cst_31 [1] : vector<8x768xf32> to vector<8xf32>
    %86 = vector.shape_cast %85 : vector<8xf32> to vector<8x1xf32>
    %cst_32 = arith.constant 0.001953125 : f32
    %87 = vector.broadcast %cst_32 : f32 to vector<8x1xf32>
    %88 = arith.mulf %83, %87 : vector<8x1xf32>
    %cst_33 = arith.constant 0.001953125 : f32
    %89 = vector.broadcast %cst_33 : f32 to vector<8x1xf32>
    %90 = arith.mulf %86, %89 : vector<8x1xf32>
    %91 = arith.mulf %88, %88 : vector<8x1xf32>
    %92 = arith.subf %90, %91 : vector<8x1xf32>
    %93 = vector.broadcast %88 : vector<8x1xf32> to vector<8x768xf32>
    %94 = arith.subf %79, %93 : vector<8x768xf32>
    %cst_34 = arith.constant 9.99999974E-6 : f32
    %95 = vector.broadcast %cst_34 : f32 to vector<8x1xf32>
    %96 = arith.addf %92, %95 : vector<8x1xf32>
    %97 = math.rsqrt %96 : vector<8x1xf32>
    %98 = vector.broadcast %97 : vector<8x1xf32> to vector<8x768xf32>
    %99 = arith.mulf %94, %98 : vector<8x768xf32>
    %cst_35 = arith.constant 0.000000e+00 : f32
    %100 = vector.broadcast %cst_35 : f32 to vector<8x768xf32>
    %101 = arith.maximumf %99, %100 : vector<8x768xf32>
    %102 = vector.broadcast %0 : vector<1x768xf32> to vector<8x768xf32>
    %103 = arith.mulf %101, %102 : vector<8x768xf32>
    %cst_36 = arith.constant 0.000000e+00 : f32
    %104 = vector.broadcast %cst_36 : f32 to vector<8x18xf32>
    %105 = vector.extract_strided_slice %103 {offsets = [0, 18], sizes = [8, 750], strides = [1, 1]} : vector<8x768xf32> to vector<8x750xf32>
    %106 = tpu.concatenate %105, %104 in 1 : vector<8x750xf32>, vector<8x18xf32> -> vector<8x768xf32>
    %107 = arith.addf %103, %106 : vector<8x768xf32>
    %cst_37 = arith.constant 0.000000e+00 : f32
    %108 = vector.broadcast %cst_37 : f32 to vector<8x1xf32>
    %109 = vector.extract_strided_slice %107 {offsets = [0, 1], sizes = [8, 767], strides = [1, 1]} : vector<8x768xf32> to vector<8x767xf32>
    %110 = tpu.concatenate %109, %108 in 1 : vector<8x767xf32>, vector<8x1xf32> -> vector<8x768xf32>
    %111 = arith.addf %107, %110 : vector<8x768xf32>
    %cst_38 = arith.constant 2.500000e-01 : f32
    %112 = vector.broadcast %cst_38 : f32 to vector<8x768xf32>
    %113 = arith.mulf %112, %111 : vector<8x768xf32>
    %c0_39 = arith.constant 0 : index
    %c0_40 = arith.constant 0 : index
    %114 = vector.load %arg4[%c0_39, %c0_40] : memref<768x128xf32, #tpu.memory_space<vmem>>, vector<768x128xf32>
    %cst_41 = arith.constant dense<0.000000e+00> : vector<8x128xf32>
    %115 = tpu.matmul %113, %114, %cst_41 {dimension_numbers = #tpu.dot_dimension_numbers<[1], [0], [0], [1], [0, 0, 1, 1], [], []>} : vector<8x768xf32>, vector<768x128xf32>, vector<8x128xf32> -> vector<8x128xf32>
    %c0_42 = arith.constant 0 : index
    %c0_43 = arith.constant 0 : index
    %116 = vector.load %arg5[%c0_42, %c0_43] : memref<8x128xf32, #tpu.memory_space<vmem>>, vector<8x128xf32>
    tpu.vector_store %arg5[%c0_42, %c0_43], %115 {strides = array<i32>} : memref<8x128xf32, #tpu.memory_space<vmem>>, vector<8x128xf32>,
    return
  }
}

</mosaic_0001>

<llo_original>
// kernel: tpu_custom_call.1
$region0: #{tpu_custom_call.1}
  #allocation0 [shape = 'u32[]', space=smem, size = 0x4, offset = 0x4, fixed_abs, tag = 'smem constant byte address 0x4 - core index']
  #allocation1 [shape = 'u32[72,128]{1,0:T(1,128)}', space=vmem, size = 0x9000, scoped, tag = 'internal scratch']
  %s0 = inlined_call_operand.hbm [shape: f32[8,768], index: 0, kind: input, shape index: {}]
  %s1 = inlined_call_operand.hbm [shape: f32[8,72], index: 1, kind: input, shape index: {}]
  %s2 = inlined_call_operand.hbm [shape: f32[8,72], index: 2, kind: input, shape index: {}]
  %s3 = inlined_call_operand.hbm [shape: f32[1,768], index: 3, kind: input, shape index: {}]
  %s4 = inlined_call_operand.hbm [shape: f32[768,128], index: 4, kind: input, shape index: {}]
  %s5 = inlined_call_operand.hbm [shape: f32[8,128], index: 5, kind: output, shape index: {}]
  %s6 = sld [smem:[#allocation0]]
  $region50: #{tpu_custom_call.1} parent=0
    _
  %s8 = ssub.s32 1, %s6
  %s9 = scalar_select 0, %s8, %s6
  $region1: #{tpu_custom_call.1} parent=0
    #allocation2 [shape = 'u8[24576]{0}', space=vmem, size = 0x6000, scoped, tag = 'input window, operand 0, single buffered']
    #allocation3 [shape = 's32[1]{0}', space=sflag, size = 0x4, scoped, tag = 'scoped memory for tpu_custom_call.1']
    #allocation4 [shape = 's32[1]{0}', space=sflag, size = 0x4, scoped, tag = 'scoped memory for tpu_custom_call.1']
    #allocation5 [shape = 'u8[4096]{0}', space=vmem, size = 0x1000, scoped, tag = 'input window, operand 1, single buffered']
    #allocation6 [shape = 's32[1]{0}', space=sflag, size = 0x4, scoped, tag = 'scoped memory for tpu_custom_call.1']
    #allocation7 [shape = 'u8[4096]{0}', space=vmem, size = 0x1000, scoped, tag = 'input window, operand 2, single buffered']
    #allocation8 [shape = 'u8[3072]{0}', space=vmem, size = 0xc00, scoped, tag = 'input window, operand 3, single buffered']
    #allocation9 [shape = 's32[1]{0}', space=sflag, size = 0x4, scoped, tag = 'scoped memory for tpu_custom_call.1']
    #allocation10 [shape = 'u8[393216]{0}', space=vmem, size = 0x60000, scoped, tag = 'input window, operand 4, single buffered']
    #allocation11 [shape = 'u8[4096]{0}', space=vmem, size = 0x1000, scoped, tag = 'output window, operand 0, single buffered']
    %10 = vsyncpa [#allocation3], 0
    %11 = vsyncpa [#allocation6], 0
    %12 = vsyncpa [#allocation9], 0
    %13 = vsyncpa [#allocation4], 0
    // Predicated region
    $region2: #{tpu_custom_call.1} parent=1 // pred_check
      _
    $region3: #{tpu_custom_call.1} parent=1 // pred_check_branch
      %15 = sbr.rel (0) target = $region5
    $region4: #{tpu_custom_call.1} parent=1 // pred_region
      %17 = vsyncadd [#allocation3], 0
      %s19 = sshll.u32 %s0, 4
      %s20 = int_to_ptr.hbm [resolvable:$true] %s19
      %s21 = sshll.u32 [#allocation2], 4
      %s22 = int_to_ptr.vmem [resolvable:$true] %s21
      %24 = dma.hbm_to_vmem [thread:$0]  %s20, 768, %s22, [#allocation3]
    $region5: #{tpu_custom_call.1} parent=1 // pred_fallthru
      _
    // Predicated region
    $region6: #{tpu_custom_call.1} parent=1 // pred_check
      _
    $region7: #{tpu_custom_call.1} parent=1 // pred_check_branch
      %26 = sbr.rel (0) target = $region9
    $region8: #{tpu_custom_call.1} parent=1 // pred_region
      %28 = vsyncadd [#allocation6], 0
      %s30 = sshll.u32 %s1, 4
      %s31 = int_to_ptr.hbm [resolvable:$true] %s30
      %s32 = sshll.u32 [#allocation5], 4
      %s33 = int_to_ptr.vmem [resolvable:$true] %s32
      %35 = dma.hbm_to_vmem [thread:$0]  %s31, 128, %s33, [#allocation6]
    $region9: #{tpu_custom_call.1} parent=1 // pred_fallthru
      _
    // Predicated region
    $region10: #{tpu_custom_call.1} parent=1 // pred_check
      _
    $region11: #{tpu_custom_call.1} parent=1 // pred_check_branch
      %37 = sbr.rel (0) target = $region13
    $region12: #{tpu_custom_call.1} parent=1 // pred_region
      %39 = vsyncadd [#allocation6], 0
      %s41 = sshll.u32 %s2, 4
      %s42 = int_to_ptr.hbm [resolvable:$true] %s41
      %s43 = sshll.u32 [#allocation7], 4
      %s44 = int_to_ptr.vmem [resolvable:$true] %s43
      %46 = dma.hbm_to_vmem [thread:$0]  %s42, 128, %s44, [#allocation6]
    $region13: #{tpu_custom_call.1} parent=1 // pred_fallthru
      _
    // Predicated region
    $region14: #{tpu_custom_call.1} parent=1 // pred_check
      _
    $region15: #{tpu_custom_call.1} parent=1 // pred_check_branch
      %48 = sbr.rel (0) target = $region17
    $region16: #{tpu_custom_call.1} parent=1 // pred_region
      %50 = vsyncadd [#allocation9], 0
      %s52 = sshll.u32 %s3, 4
      %s53 = int_to_ptr.hbm [resolvable:$true] %s52
      %s54 = sshll.u32 [#allocation8], 4
      %s55 = int_to_ptr.vmem [resolvable:$true] %s54
      %57 = dma.hbm_to_vmem [thread:$0]  %s53, 96, %s55, [#allocation9]
    $region17: #{tpu_custom_call.1} parent=1 // pred_fallthru
      _
    // Predicated region
    $region18: #{tpu_custom_call.1} parent=1 // pred_check
      _
    $region19: #{tpu_custom_call.1} parent=1 // pred_check_branch
      %59 = sbr.rel (0) target = $region21
    $region20: #{tpu_custom_call.1} parent=1 // pred_region
      %61 = vsyncadd [#allocation9], 0
      %s62 = sshll.u32 %s4, 4
      %s63 = int_to_ptr.hbm [resolvable:$true] %s62
      %s64 = sshll.u32 [#allocation10], 4
      %s65 = int_to_ptr.vmem [resolvable:$true] %s64
      %70 = dma.hbm_to_vmem [thread:$0]  %s63, 12288, %s65, [#allocation9], 128, 128, 8
    $region21: #{tpu_custom_call.1} parent=1 // pred_fallthru
      _
    // Predicated region
    $region22: #{tpu_custom_call.1} parent=1 // pred_check
      _
    $region23: #{tpu_custom_call.1} parent=1 // pred_check_branch
      %72 = sbr.rel (0) target = $region25
    $region24: #{tpu_custom_call.1} parent=1 // pred_region
      %74 = dma.done [#allocation3], 768
    $region25: #{tpu_custom_call.1} parent=1 // pred_fallthru
      _
    // Predicated region
    $region26: #{tpu_custom_call.1} parent=1 // pred_check
      _
    $region27: #{tpu_custom_call.1} parent=1 // pred_check_branch
      %76 = sbr.rel (0) target = $region29
    $region28: #{tpu_custom_call.1} parent=1 // pred_region
      %78 = dma.done [#allocation6], 128
    $region29: #{tpu_custom_call.1} parent=1 // pred_fallthru
      _
    // Predicated region
    $region30: #{tpu_custom_call.1} parent=1 // pred_check
      _
    $region31: #{tpu_custom_call.1} parent=1 // pred_check_branch
      %80 = sbr.rel (0) target = $region33
    $region32: #{tpu_custom_call.1} parent=1 // pred_region
      %82 = dma.done [#allocation6], 128
    $region33: #{tpu_custom_call.1} parent=1 // pred_fallthru
      _
    // Predicated region
    $region34: #{tpu_custom_call.1} parent=1 // pred_check
      _
    $region35: #{tpu_custom_call.1} parent=1 // pred_check_branch
      %84 = sbr.rel (0) target = $region37
    $region36: #{tpu_custom_call.1} parent=1 // pred_region
      %86 = dma.done [#allocation9], 96
    $region37: #{tpu_custom_call.1} parent=1 // pred_fallthru
      _
    // Predicated region
    $region38: #{tpu_custom_call.1} parent=1 // pred_check
      _
    $region39: #{tpu_custom_call.1} parent=1 // pred_check_branch
      %88 = sbr.rel (0) target = $region41
    $region40: #{tpu_custom_call.1} parent=1 // pred_region
      %90 = dma.done [#allocation9], 12288
    $region41: #{tpu_custom_call.1} parent=1 // pred_fallthru
      _
    %v91 = vld [vmem:[#allocation8] sm:$0x3f]
    %v92 = vld [vmem:[#allocation2] sm:$0xff]
    %v93 = vld [vmem:[#allocation2 + $0x8] sm:$0xff]
    %v94 = vld [vmem:[#allocation2 + $0x10] sm:$0xff]
    %v95 = vld [vmem:[#allocation2 + $0x18] sm:$0xff]
    %v96 = vld [vmem:[#allocation2 + $0x20] sm:$0xff]
    %v97 = vld [vmem:[#allocation2 + $0x28] sm:$0xff]
    %v98 = vld [vmem:[#allocation5] sm:$0xff]
    %105 = vrot.lane.b32.xlu0 %v92, 19
    %v106 = vpop.permute.xlu0 %105
    %107 = vrot.lane.b32.xlu0 %v93, 19
    %v108 = vpop.permute.xlu0 %107
    %109 = vrot.lane.b32.xlu0 %v94, 19
    %v110 = vpop.permute.xlu0 %109
    %111 = vrot.lane.b32.xlu0 %v95, 19
    %v112 = vpop.permute.xlu0 %111
    %113 = vrot.lane.b32.xlu0 %v96, 19
    %v114 = vpop.permute.xlu0 %113
    %115 = vrot.lane.b32.xlu0 %v97, 19
    %v116 = vpop.permute.xlu0 %115
    %vm117 = vcmask 154624
    %v118 = vsel %vm117, %v106, %v108
    %v119 = vsel %vm117, %v108, %v110
    %v120 = vsel %vm117, %v110, %v112
    %v121 = vsel %vm117, %v112, %v114
    %v122 = vsel %vm117, %v114, %v116
    %v129 = vsel %vm117, 0.0, %v106
    %130 = vrot.lane.b32.xlu0 %v92, 18
    %v131 = vpop.permute.xlu0 %130
    %132 = vrot.lane.b32.xlu0 %v93, 18
    %v133 = vpop.permute.xlu0 %132
    %134 = vrot.lane.b32.xlu0 %v94, 18
    %v135 = vpop.permute.xlu0 %134
    %136 = vrot.lane.b32.xlu0 %v95, 18
    %v137 = vpop.permute.xlu0 %136
    %138 = vrot.lane.b32.xlu0 %v96, 18
    %v139 = vpop.permute.xlu0 %138
    %140 = vrot.lane.b32.xlu0 %v97, 18
    %v141 = vpop.permute.xlu0 %140
    %vm142 = vcmask 146432
    %v143 = vsel %vm142, %v131, %v133
    %v144 = vsel %vm142, %v133, %v135
    %v145 = vsel %vm142, %v135, %v137
    %v146 = vsel %vm142, %v137, %v139
    %v147 = vsel %vm142, %v139, %v141
    %v154 = vsel %vm142, 0.0, %v131
    %155 = vrot.lane.b32.xlu0 %v92, 17
    %v156 = vpop.permute.xlu0 %155
    %157 = vrot.lane.b32.xlu0 %v93, 17
    %v158 = vpop.permute.xlu0 %157
    %159 = vrot.lane.b32.xlu0 %v94, 17
    %v160 = vpop.permute.xlu0 %159
    %161 = vrot.lane.b32.xlu0 %v95, 17
    %v162 = vpop.permute.xlu0 %161
    %163 = vrot.lane.b32.xlu0 %v96, 17
    %v164 = vpop.permute.xlu0 %163
    %165 = vrot.lane.b32.xlu0 %v97, 17
    %v166 = vpop.permute.xlu0 %165
    %vm167 = vcmask 138240
    %v168 = vsel %vm167, %v156, %v158
    %v169 = vsel %vm167, %v158, %v160
    %v170 = vsel %vm167, %v160, %v162
    %v171 = vsel %vm167, %v162, %v164
    %v172 = vsel %vm167, %v164, %v166
    %v179 = vsel %vm167, 0.0, %v156
    %180 = vrot.lane.b32.xlu0 %v92, 1
    %v181 = vpop.permute.xlu0 %180
    %182 = vrot.lane.b32.xlu0 %v93, 1
    %v183 = vpop.permute.xlu0 %182
    %184 = vrot.lane.b32.xlu0 %v94, 1
    %v185 = vpop.permute.xlu0 %184
    %186 = vrot.lane.b32.xlu0 %v95, 1
    %v187 = vpop.permute.xlu0 %186
    %188 = vrot.lane.b32.xlu0 %v96, 1
    %v189 = vpop.permute.xlu0 %188
    %190 = vrot.lane.b32.xlu0 %v97, 1
    %v191 = vpop.permute.xlu0 %190
    %vm192 = vcmask 7168
    %v193 = vsel %vm192, %v181, %v183
    %v194 = vsel %vm192, %v183, %v185
    %v195 = vsel %vm192, %v185, %v187
    %v196 = vsel %vm192, %v187, %v189
    %v197 = vsel %vm192, %v189, %v191
    %v204 = vsel %vm192, 0.0, %v181
    %205 = vrot.lane.b32.xlu0 %v92, 127
    %v206 = vpop.permute.xlu0 %205
    %207 = vrot.lane.b32.xlu0 %v93, 127
    %v208 = vpop.permute.xlu0 %207
    %209 = vrot.lane.b32.xlu0 %v94, 127
    %v210 = vpop.permute.xlu0 %209
    %211 = vrot.lane.b32.xlu0 %v95, 127
    %v212 = vpop.permute.xlu0 %211
    %213 = vrot.lane.b32.xlu0 %v96, 127
    %v214 = vpop.permute.xlu0 %213
    %215 = vrot.lane.b32.xlu0 %v97, 127
    %v216 = vpop.permute.xlu0 %215
    %vm217 = vcmask 1039360
    %v218 = vsel %vm217, %v206, %v208
    %v219 = vsel %vm217, %v208, %v210
    %v220 = vsel %vm217, %v210, %v212
    %v221 = vsel %vm217, %v212, %v214
    %v222 = vsel %vm217, %v214, %v216
    %v229 = vsel %vm217, %v216, 0.0
    %230 = vrot.lane.b32.xlu0 %v92, 111
    %v231 = vpop.permute.xlu0 %230
    %232 = vrot.lane.b32.xlu0 %v93, 111
    %v233 = vpop.permute.xlu0 %232
    %234 = vrot.lane.b32.xlu0 %v94, 111
    %v235 = vpop.permute.xlu0 %234
    %236 = vrot.lane.b32.xlu0 %v95, 111
    %v237 = vpop.permute.xlu0 %236
    %238 = vrot.lane.b32.xlu0 %v96, 111
    %v239 = vpop.permute.xlu0 %238
    %240 = vrot.lane.b32.xlu0 %v97, 111
    %v241 = vpop.permute.xlu0 %240
    %vm242 = vcmask 908288
    %v243 = vsel %vm242, %v231, %v233
    %v244 = vsel %vm242, %v233, %v235
    %v245 = vsel %vm242, %v235, %v237
    %v246 = vsel %vm242, %v237, %v239
    %v247 = vsel %vm242, %v239, %v241
    %v254 = vsel %vm242, %v241, 0.0
    %255 = vrot.lane.b32.xlu0 %v92, 110
    %v256 = vpop.permute.xlu0 %255
    %257 = vrot.lane.b32.xlu0 %v93, 110
    %v258 = vpop.permute.xlu0 %257
    %259 = vrot.lane.b32.xlu0 %v94, 110
    %v260 = vpop.permute.xlu0 %259
    %261 = vrot.lane.b32.xlu0 %v95, 110
    %v262 = vpop.permute.xlu0 %261
    %263 = vrot.lane.b32.xlu0 %v96, 110
    %v264 = vpop.permute.xlu0 %263
    %265 = vrot.lane.b32.xlu0 %v97, 110
    %v266 = vpop.permute.xlu0 %265
    %vm267 = vcmask 900096
    %v268 = vsel %vm267, %v256, %v258
    %v269 = vsel %vm267, %v258, %v260
    %v270 = vsel %vm267, %v260, %v262
    %v271 = vsel %vm267, %v262, %v264
    %v272 = vsel %vm267, %v264, %v266
    %v279 = vsel %vm267, %v266, 0.0
    %280 = vrot.lane.b32.xlu0 %v92, 109
    %v281 = vpop.permute.xlu0 %280
    %282 = vrot.lane.b32.xlu0 %v93, 109
    %v283 = vpop.permute.xlu0 %282
    %284 = vrot.lane.b32.xlu0 %v94, 109
    %v285 = vpop.permute.xlu0 %284
    %286 = vrot.lane.b32.xlu0 %v95, 109
    %v287 = vpop.permute.xlu0 %286
    %288 = vrot.lane.b32.xlu0 %v96, 109
    %v289 = vpop.permute.xlu0 %288
    %290 = vrot.lane.b32.xlu0 %v97, 109
    %v291 = vpop.permute.xlu0 %290
    %vm292 = vcmask 891904
    %v293 = vsel %vm292, %v281, %v283
    %v294 = vsel %vm292, %v283, %v285
    %v295 = vsel %vm292, %v285, %v287
    %v296 = vsel %vm292, %v287, %v289
    %v297 = vsel %vm292, %v289, %v291
    %v304 = vsel %vm292, %v291, 0.0
    %vm305 = vcmask 588800
    %v307 = vsel %vm305, %v98, 0
    %309 = vmatpush.msra.mxu0 0.0
    %310 = vmatpush.msra.mxu0 0.0
    %311 = vmatpush.msra.mxu0 0.0
    %312 = vmatpush.msra.mxu0 0.0
    %313 = vmatpush.msra.mxu0 0.0
    %314 = vmatpush.msra.mxu0 0.0
    %315 = vmatpush.msra.mxu0 0.0
    %316 = vmatpush.msra.mxu0 %v293
    %317 = vmatpush.msra.mxu0 %v268
    %318 = vmatpush.msra.mxu0 %v243
    %319 = vmatpush.msra.mxu0 %v218
    %320 = vmatpush.msra.mxu0 %v92
    %321 = vmatpush.msra.mxu0 %v204
    %322 = vmatpush.msra.mxu0 %v179
    %323 = vmatpush.msra.mxu0 %v154
    %324 = vmatpush.msra.mxu0 %v129
    %325 = vmatmul.f32.gmra.mxu0 %v307
    %v326 = vpop.f32.mrf.mxu0
    %v327 = vadd.f32 0.0, %v326
    %328 = vdwg.mxu0
    %329 = vmatpush.msra.mxu0 0.0
    %330 = vmatpush.msra.mxu0 0.0
    %331 = vmatpush.msra.mxu0 0.0
    %332 = vmatpush.msra.mxu0 0.0
    %333 = vmatpush.msra.mxu0 0.0
    %334 = vmatpush.msra.mxu0 0.0
    %335 = vmatpush.msra.mxu0 0.0
    %336 = vmatpush.msra.mxu0 %v294
    %337 = vmatpush.msra.mxu0 %v269
    %338 = vmatpush.msra.mxu0 %v244
    %339 = vmatpush.msra.mxu0 %v219
    %340 = vmatpush.msra.mxu0 %v93
    %341 = vmatpush.msra.mxu0 %v193
    %342 = vmatpush.msra.mxu0 %v168
    %343 = vmatpush.msra.mxu0 %v143
    %344 = vmatpush.msra.mxu0 %v118
    %345 = vmatmul.f32.gmra.mxu0 %v307
    %v346 = vpop.f32.mrf.mxu0
    %v347 = vadd.f32 0.0, %v346
    %348 = vdwg.mxu0
    %349 = vmatpush.msra.mxu0 0.0
    %350 = vmatpush.msra.mxu0 0.0
    %351 = vmatpush.msra.mxu0 0.0
    %352 = vmatpush.msra.mxu0 0.0
    %353 = vmatpush.msra.mxu0 0.0
    %354 = vmatpush.msra.mxu0 0.0
    %355 = vmatpush.msra.mxu0 0.0
    %356 = vmatpush.msra.mxu0 %v295
    %357 = vmatpush.msra.mxu0 %v270
    %358 = vmatpush.msra.mxu0 %v245
    %359 = vmatpush.msra.mxu0 %v220
    %360 = vmatpush.msra.mxu0 %v94
    %361 = vmatpush.msra.mxu0 %v194
    %362 = vmatpush.msra.mxu0 %v169
    %363 = vmatpush.msra.mxu0 %v144
    %364 = vmatpush.msra.mxu0 %v119
    %365 = vmatmul.f32.gmra.mxu0 %v307
    %v366 = vpop.f32.mrf.mxu0
    %v367 = vadd.f32 0.0, %v366
    %368 = vdwg.mxu0
    %369 = vmatpush.msra.mxu0 0.0
    %370 = vmatpush.msra.mxu0 0.0
    %371 = vmatpush.msra.mxu0 0.0
    %372 = vmatpush.msra.mxu0 0.0
    %373 = vmatpush.msra.mxu0 0.0
    %374 = vmatpush.msra.mxu0 0.0
    %375 = vmatpush.msra.mxu0 0.0
    %376 = vmatpush.msra.mxu0 %v296
    %377 = vmatpush.msra.mxu0 %v271
    %378 = vmatpush.msra.mxu0 %v246
    %379 = vmatpush.msra.mxu0 %v221
    %380 = vmatpush.msra.mxu0 %v95
    %381 = vmatpush.msra.mxu0 %v195
    %382 = vmatpush.msra.mxu0 %v170
    %383 = vmatpush.msra.mxu0 %v145
    %384 = vmatpush.msra.mxu0 %v120
    %385 = vmatmul.f32.gmra.mxu0 %v307
    %v386 = vpop.f32.mrf.mxu0
    %v387 = vadd.f32 0.0, %v386
    %388 = vdwg.mxu0
    %389 = vmatpush.msra.mxu0 0.0
    %390 = vmatpush.msra.mxu0 0.0
    %391 = vmatpush.msra.mxu0 0.0
    %392 = vmatpush.msra.mxu0 0.0
    %393 = vmatpush.msra.mxu0 0.0
    %394 = vmatpush.msra.mxu0 0.0
    %395 = vmatpush.msra.mxu0 0.0
    %396 = vmatpush.msra.mxu0 %v297
    %397 = vmatpush.msra.mxu0 %v272
    %398 = vmatpush.msra.mxu0 %v247
    %399 = vmatpush.msra.mxu0 %v222
    %400 = vmatpush.msra.mxu0 %v96
    %401 = vmatpush.msra.mxu0 %v196
    %402 = vmatpush.msra.mxu0 %v171
    %403 = vmatpush.msra.mxu0 %v146
    %404 = vmatpush.msra.mxu0 %v121
    %405 = vmatmul.f32.gmra.mxu0 %v307
    %v406 = vpop.f32.mrf.mxu0
    %v407 = vadd.f32 0.0, %v406
    %408 = vdwg.mxu0
    %409 = vmatpush.msra.mxu0 0.0
    %410 = vmatpush.msra.mxu0 0.0
    %411 = vmatpush.msra.mxu0 0.0
    %412 = vmatpush.msra.mxu0 0.0
    %413 = vmatpush.msra.mxu0 0.0
    %414 = vmatpush.msra.mxu0 0.0
    %415 = vmatpush.msra.mxu0 0.0
    %416 = vmatpush.msra.mxu0 %v304
    %417 = vmatpush.msra.mxu0 %v279
    %418 = vmatpush.msra.mxu0 %v254
    %419 = vmatpush.msra.mxu0 %v229
    %420 = vmatpush.msra.mxu0 %v97
    %421 = vmatpush.msra.mxu0 %v197
    %422 = vmatpush.msra.mxu0 %v172
    %423 = vmatpush.msra.mxu0 %v147
    %424 = vmatpush.msra.mxu0 %v122
    %425 = vmatmul.f32.gmra.mxu0 %v307
    %v426 = vpop.f32.mrf.mxu0
    %v427 = vadd.f32 0.0, %v426
    %428 = vdwg.mxu0
    %v430 = vperm.slane %v91, 0
    %v431 = vperm.slane %v91, 1
    %v432 = vperm.slane %v91, 2
    %v433 = vperm.slane %v91, 3
    %v434 = vperm.slane %v91, 4
    %v435 = vperm.slane %v91, 5
    %v442 = vmul.f32 %v327, %v430
    %v443 = vmul.f32 %v347, %v431
    %v444 = vmul.f32 %v367, %v432
    %v445 = vmul.f32 %v387, %v433
    %v446 = vmul.f32 %v407, %v434
    %v447 = vmul.f32 %v427, %v435
    %v448 = vadd.f32 %v442, %v443
    %v449 = vadd.f32 %v448, %v444
    %v450 = vadd.f32 %v449, %v445
    %v451 = vadd.f32 %v450, %v446
    %v452 = vadd.f32 %v451, %v447
    %453 = vadd.xlane.f32.xlu0 %v452
    %v454 = vpop.xlane.xlu0 %453
    %v455 = vmul.f32 %v442, %v442
    %v456 = vmul.f32 %v443, %v443
    %v457 = vmul.f32 %v444, %v444
    %v458 = vmul.f32 %v445, %v445
    %v459 = vmul.f32 %v446, %v446
    %v460 = vmul.f32 %v447, %v447
    %v461 = vadd.f32 %v455, %v456
    %v462 = vadd.f32 %v461, %v457
    %v463 = vadd.f32 %v462, %v458
    %v464 = vadd.f32 %v463, %v459
    %v465 = vadd.f32 %v464, %v460
    %466 = vadd.xlane.f32.xlu0 %v465
    %v467 = vpop.xlane.xlu0 %466
    %v468 = vmul.f32 %v454, 0.001953125
    %v469 = vmul.f32 %v467, 0.001953125
    %v470 = vmul.f32 %v468, %v468
    %v471 = vsub.f32 %v469, %v470
    %v472 = vsub.f32 %v327, %v468
    %v473 = vsub.f32 %v347, %v468
    %v474 = vsub.f32 %v367, %v468
    %v475 = vsub.f32 %v387, %v468
    %v476 = vsub.f32 %v407, %v468
    %v477 = vsub.f32 %v427, %v468
    %v478 = vadd.f32 %v471, 1e-05
    %v479 = vrsqrt.pop %v478
    %v480 = vmul.f32 %v479, %v478
    %v481 = vmul.f32 %v480, %v479
    %v482 = vmul.f32 0.5, %v481
    %v483 = vsub.f32 1.5, %v482
    %v484 = vmul.f32 %v479, %v483
    %vm485 = vweird.f32 %v478
    %vm486 = vweird.f32 %v479
    %vm487 = vmor %vm485, %vm486
    %v488 = vsel %vm487, %v479, %v484
    %v489 = vmul.f32 %v472, %v488
    %v490 = vmul.f32 %v473, %v488
    %v491 = vmul.f32 %v474, %v488
    %v492 = vmul.f32 %v475, %v488
    %v493 = vmul.f32 %v476, %v488
    %v494 = vmul.f32 %v477, %v488
    %v495 = vmax.f32 %v489, 0.0
    %v496 = vmax.f32 %v490, 0.0
    %v497 = vmax.f32 %v491, 0.0
    %v498 = vmax.f32 %v492, 0.0
    %v499 = vmax.f32 %v493, 0.0
    %v500 = vmax.f32 %v494, 0.0
    %v501 = vmul.f32 %v495, %v430
    %v502 = vmul.f32 %v496, %v431
    %v503 = vmul.f32 %v497, %v432
    %v504 = vmul.f32 %v498, %v433
    %v505 = vmul.f32 %v499, %v434
    %v506 = vmul.f32 %v500, %v435
    %v507 = vld [vmem:[#allocation7] sm:$0xff]
    %514 = vrot.lane.b32.xlu0 %v501, 19
    %v515 = vpop.permute.xlu0 %514
    %516 = vrot.lane.b32.xlu0 %v502, 19
    %v517 = vpop.permute.xlu0 %516
    %518 = vrot.lane.b32.xlu0 %v503, 19
    %v519 = vpop.permute.xlu0 %518
    %520 = vrot.lane.b32.xlu0 %v504, 19
    %v521 = vpop.permute.xlu0 %520
    %522 = vrot.lane.b32.xlu0 %v505, 19
    %v523 = vpop.permute.xlu0 %522
    %524 = vrot.lane.b32.xlu0 %v506, 19
    %v525 = vpop.permute.xlu0 %524
    %v526 = vsel %vm117, %v515, %v517
    %v527 = vsel %vm117, %v517, %v519
    %v528 = vsel %vm117, %v519, %v521
    %v529 = vsel %vm117, %v521, %v523
    %v530 = vsel %vm117, %v523, %v525
    %v537 = vsel %vm117, 0.0, %v515
    %538 = vrot.lane.b32.xlu0 %v501, 18
    %v539 = vpop.permute.xlu0 %538
    %540 = vrot.lane.b32.xlu0 %v502, 18
    %v541 = vpop.permute.xlu0 %540
    %542 = vrot.lane.b32.xlu0 %v503, 18
    %v543 = vpop.permute.xlu0 %542
    %544 = vrot.lane.b32.xlu0 %v504, 18
    %v545 = vpop.permute.xlu0 %544
    %546 = vrot.lane.b32.xlu0 %v505, 18
    %v547 = vpop.permute.xlu0 %546
    %548 = vrot.lane.b32.xlu0 %v506, 18
    %v549 = vpop.permute.xlu0 %548
    %v550 = vsel %vm142, %v539, %v541
    %v551 = vsel %vm142, %v541, %v543
    %v552 = vsel %vm142, %v543, %v545
    %v553 = vsel %vm142, %v545, %v547
    %v554 = vsel %vm142, %v547, %v549
    %v561 = vsel %vm142, 0.0, %v539
    %562 = vrot.lane.b32.xlu0 %v501, 17
    %v563 = vpop.permute.xlu0 %562
    %564 = vrot.lane.b32.xlu0 %v502, 17
    %v565 = vpop.permute.xlu0 %564
    %566 = vrot.lane.b32.xlu0 %v503, 17
    %v567 = vpop.permute.xlu0 %566
    %568 = vrot.lane.b32.xlu0 %v504, 17
    %v569 = vpop.permute.xlu0 %568
    %570 = vrot.lane.b32.xlu0 %v505, 17
    %v571 = vpop.permute.xlu0 %570
    %572 = vrot.lane.b32.xlu0 %v506, 17
    %v573 = vpop.permute.xlu0 %572
    %v574 = vsel %vm167, %v563, %v565
    %v575 = vsel %vm167, %v565, %v567
    %v576 = vsel %vm167, %v567, %v569
    %v577 = vsel %vm167, %v569, %v571
    %v578 = vsel %vm167, %v571, %v573
    %v585 = vsel %vm167, 0.0, %v563
    %586 = vrot.lane.b32.xlu0 %v501, 1
    %v587 = vpop.permute.xlu0 %586
    %588 = vrot.lane.b32.xlu0 %v502, 1
    %v589 = vpop.permute.xlu0 %588
    %590 = vrot.lane.b32.xlu0 %v503, 1
    %v591 = vpop.permute.xlu0 %590
    %592 = vrot.lane.b32.xlu0 %v504, 1
    %v593 = vpop.permute.xlu0 %592
    %594 = vrot.lane.b32.xlu0 %v505, 1
    %v595 = vpop.permute.xlu0 %594
    %596 = vrot.lane.b32.xlu0 %v506, 1
    %v597 = vpop.permute.xlu0 %596
    %v598 = vsel %vm192, %v587, %v589
    %v599 = vsel %vm192, %v589, %v591
    %v600 = vsel %vm192, %v591, %v593
    %v601 = vsel %vm192, %v593, %v595
    %v602 = vsel %vm192, %v595, %v597
    %v609 = vsel %vm192, 0.0, %v587
    %610 = vrot.lane.b32.xlu0 %v501, 127
    %v611 = vpop.permute.xlu0 %610
    %612 = vrot.lane.b32.xlu0 %v502, 127
    %v613 = vpop.permute.xlu0 %612
    %614 = vrot.lane.b32.xlu0 %v503, 127
    %v615 = vpop.permute.xlu0 %614
    %616 = vrot.lane.b32.xlu0 %v504, 127
    %v617 = vpop.permute.xlu0 %616
    %618 = vrot.lane.b32.xlu0 %v505, 127
    %v619 = vpop.permute.xlu0 %618
    %620 = vrot.lane.b32.xlu0 %v506, 127
    %v621 = vpop.permute.xlu0 %620
    %v622 = vsel %vm217, %v611, %v613
    %v623 = vsel %vm217, %v613, %v615
    %v624 = vsel %vm217, %v615, %v617
    %v625 = vsel %vm217, %v617, %v619
    %v626 = vsel %vm217, %v619, %v621
    %v633 = vsel %vm217, %v621, 0.0
    %634 = vrot.lane.b32.xlu0 %v501, 111
    %v635 = vpop.permute.xlu0 %634
    %636 = vrot.lane.b32.xlu0 %v502, 111
    %v637 = vpop.permute.xlu0 %636
    %638 = vrot.lane.b32.xlu0 %v503, 111
    %v639 = vpop.permute.xlu0 %638
    %640 = vrot.lane.b32.xlu0 %v504, 111
    %v641 = vpop.permute.xlu0 %640
    %642 = vrot.lane.b32.xlu0 %v505, 111
    %v643 = vpop.permute.xlu0 %642
    %644 = vrot.lane.b32.xlu0 %v506, 111
    %v645 = vpop.permute.xlu0 %644
    %v646 = vsel %vm242, %v635, %v637
    %v647 = vsel %vm242, %v637, %v639
    %v648 = vsel %vm242, %v639, %v641
    %v649 = vsel %vm242, %v641, %v643
    %v650 = vsel %vm242, %v643, %v645
    %v657 = vsel %vm242, %v645, 0.0
    %658 = vrot.lane.b32.xlu0 %v501, 110
    %v659 = vpop.permute.xlu0 %658
    %660 = vrot.lane.b32.xlu0 %v502, 110
    %v661 = vpop.permute.xlu0 %660
    %662 = vrot.lane.b32.xlu0 %v503, 110
    %v663 = vpop.permute.xlu0 %662
    %664 = vrot.lane.b32.xlu0 %v504, 110
    %v665 = vpop.permute.xlu0 %664
    %666 = vrot.lane.b32.xlu0 %v505, 110
    %v667 = vpop.permute.xlu0 %666
    %668 = vrot.lane.b32.xlu0 %v506, 110
    %v669 = vpop.permute.xlu0 %668
    %v670 = vsel %vm267, %v659, %v661
    %v671 = vsel %vm267, %v661, %v663
    %v672 = vsel %vm267, %v663, %v665
    %v673 = vsel %vm267, %v665, %v667
    %v674 = vsel %vm267, %v667, %v669
    %v681 = vsel %vm267, %v669, 0.0
    %682 = vrot.lane.b32.xlu0 %v501, 109
    %v683 = vpop.permute.xlu0 %682
    %684 = vrot.lane.b32.xlu0 %v502, 109
    %v685 = vpop.permute.xlu0 %684
    %686 = vrot.lane.b32.xlu0 %v503, 109
    %v687 = vpop.permute.xlu0 %686
    %688 = vrot.lane.b32.xlu0 %v504, 109
    %v689 = vpop.permute.xlu0 %688
    %690 = vrot.lane.b32.xlu0 %v505, 109
    %v691 = vpop.permute.xlu0 %690
    %692 = vrot.lane.b32.xlu0 %v506, 109
    %v693 = vpop.permute.xlu0 %692
    %v694 = vsel %vm292, %v683, %v685
    %v695 = vsel %vm292, %v685, %v687
    %v696 = vsel %vm292, %v687, %v689
    %v697 = vsel %vm292, %v689, %v691
    %v698 = vsel %vm292, %v691, %v693
    %v705 = vsel %vm292, %v693, 0.0
    %v707 = vsel %vm305, %v507, 0
    %709 = vmatpush.msra.mxu0 0.0
    %710 = vmatpush.msra.mxu0 0.0
    %711 = vmatpush.msra.mxu0 0.0
    %712 = vmatpush.msra.mxu0 0.0
    %713 = vmatpush.msra.mxu0 0.0
    %714 = vmatpush.msra.mxu0 0.0
    %715 = vmatpush.msra.mxu0 0.0
    %716 = vmatpush.msra.mxu0 %v694
    %717 = vmatpush.msra.mxu0 %v670
    %718 = vmatpush.msra.mxu0 %v646
    %719 = vmatpush.msra.mxu0 %v622
    %720 = vmatpush.msra.mxu0 %v501
    %721 = vmatpush.msra.mxu0 %v609
    %722 = vmatpush.msra.mxu0 %v585
    %723 = vmatpush.msra.mxu0 %v561
    %724 = vmatpush.msra.mxu0 %v537
    %725 = vmatmul.f32.gmra.mxu0 %v707
    %v726 = vpop.f32.mrf.mxu0
    %v727 = vadd.f32 0.0, %v726
    %728 = vdwg.mxu0
    %729 = vmatpush.msra.mxu0 0.0
    %730 = vmatpush.msra.mxu0 0.0
    %731 = vmatpush.msra.mxu0 0.0
    %732 = vmatpush.msra.mxu0 0.0
    %733 = vmatpush.msra.mxu0 0.0
    %734 = vmatpush.msra.mxu0 0.0
    %735 = vmatpush.msra.mxu0 0.0
    %736 = vmatpush.msra.mxu0 %v695
    %737 = vmatpush.msra.mxu0 %v671
    %738 = vmatpush.msra.mxu0 %v647
    %739 = vmatpush.msra.mxu0 %v623
    %740 = vmatpush.msra.mxu0 %v502
    %741 = vmatpush.msra.mxu0 %v598
    %742 = vmatpush.msra.mxu0 %v574
    %743 = vmatpush.msra.mxu0 %v550
    %744 = vmatpush.msra.mxu0 %v526
    %745 = vmatmul.f32.gmra.mxu0 %v707
    %v746 = vpop.f32.mrf.mxu0
    %v747 = vadd.f32 0.0, %v746
    %748 = vdwg.mxu0
    %749 = vmatpush.msra.mxu0 0.0
    %750 = vmatpush.msra.mxu0 0.0
    %751 = vmatpush.msra.mxu0 0.0
    %752 = vmatpush.msra.mxu0 0.0
    %753 = vmatpush.msra.mxu0 0.0
    %754 = vmatpush.msra.mxu0 0.0
    %755 = vmatpush.msra.mxu0 0.0
    %756 = vmatpush.msra.mxu0 %v696
    %757 = vmatpush.msra.mxu0 %v672
    %758 = vmatpush.msra.mxu0 %v648
    %759 = vmatpush.msra.mxu0 %v624
    %760 = vmatpush.msra.mxu0 %v503
    %761 = vmatpush.msra.mxu0 %v599
    %762 = vmatpush.msra.mxu0 %v575
    %763 = vmatpush.msra.mxu0 %v551
    %764 = vmatpush.msra.mxu0 %v527
    %765 = vmatmul.f32.gmra.mxu0 %v707
    %v766 = vpop.f32.mrf.mxu0
    %v767 = vadd.f32 0.0, %v766
    %768 = vdwg.mxu0
    %769 = vmatpush.msra.mxu0 0.0
    %770 = vmatpush.msra.mxu0 0.0
    %771 = vmatpush.msra.mxu0 0.0
    %772 = vmatpush.msra.mxu0 0.0
    %773 = vmatpush.msra.mxu0 0.0
    %774 = vmatpush.msra.mxu0 0.0
    %775 = vmatpush.msra.mxu0 0.0
    %776 = vmatpush.msra.mxu0 %v697
    %777 = vmatpush.msra.mxu0 %v673
    %778 = vmatpush.msra.mxu0 %v649
    %779 = vmatpush.msra.mxu0 %v625
    %780 = vmatpush.msra.mxu0 %v504
    %781 = vmatpush.msra.mxu0 %v600
    %782 = vmatpush.msra.mxu0 %v576
    %783 = vmatpush.msra.mxu0 %v552
    %784 = vmatpush.msra.mxu0 %v528
    %785 = vmatmul.f32.gmra.mxu0 %v707
    %v786 = vpop.f32.mrf.mxu0
    %v787 = vadd.f32 0.0, %v786
    %788 = vdwg.mxu0
    %789 = vmatpush.msra.mxu0 0.0
    %790 = vmatpush.msra.mxu0 0.0
    %791 = vmatpush.msra.mxu0 0.0
    %792 = vmatpush.msra.mxu0 0.0
    %793 = vmatpush.msra.mxu0 0.0
    %794 = vmatpush.msra.mxu0 0.0
    %795 = vmatpush.msra.mxu0 0.0
    %796 = vmatpush.msra.mxu0 %v698
    %797 = vmatpush.msra.mxu0 %v674
    %798 = vmatpush.msra.mxu0 %v650
    %799 = vmatpush.msra.mxu0 %v626
    %800 = vmatpush.msra.mxu0 %v505
    %801 = vmatpush.msra.mxu0 %v601
    %802 = vmatpush.msra.mxu0 %v577
    %803 = vmatpush.msra.mxu0 %v553
    %804 = vmatpush.msra.mxu0 %v529
    %805 = vmatmul.f32.gmra.mxu0 %v707
    %v806 = vpop.f32.mrf.mxu0
    %v807 = vadd.f32 0.0, %v806
    %808 = vdwg.mxu0
    %809 = vmatpush.msra.mxu0 0.0
    %810 = vmatpush.msra.mxu0 0.0
    %811 = vmatpush.msra.mxu0 0.0
    %812 = vmatpush.msra.mxu0 0.0
    %813 = vmatpush.msra.mxu0 0.0
    %814 = vmatpush.msra.mxu0 0.0
    %815 = vmatpush.msra.mxu0 0.0
    %816 = vmatpush.msra.mxu0 %v705
    %817 = vmatpush.msra.mxu0 %v681
    %818 = vmatpush.msra.mxu0 %v657
    %819 = vmatpush.msra.mxu0 %v633
    %820 = vmatpush.msra.mxu0 %v506
    %821 = vmatpush.msra.mxu0 %v602
    %822 = vmatpush.msra.mxu0 %v578
    %823 = vmatpush.msra.mxu0 %v554
    %824 = vmatpush.msra.mxu0 %v530
    %825 = vmatmul.f32.gmra.mxu0 %v707
    %v826 = vpop.f32.mrf.mxu0
    %v827 = vadd.f32 0.0, %v826
    %828 = vdwg.mxu0
    %v829 = vmul.f32 %v727, %v430
    %v830 = vmul.f32 %v747, %v431
    %v831 = vmul.f32 %v767, %v432
    %v832 = vmul.f32 %v787, %v433
    %v833 = vmul.f32 %v807, %v434
    %v834 = vmul.f32 %v827, %v435
    %v835 = vadd.f32 %v829, %v830
    %v836 = vadd.f32 %v835, %v831
    %v837 = vadd.f32 %v836, %v832
    %v838 = vadd.f32 %v837, %v833
    %v839 = vadd.f32 %v838, %v834
    %840 = vadd.xlane.f32.xlu0 %v839
    %v841 = vpop.xlane.xlu0 %840
    %v842 = vmul.f32 %v829, %v829
    %v843 = vmul.f32 %v830, %v830
    %v844 = vmul.f32 %v831, %v831
    %v845 = vmul.f32 %v832, %v832
    %v846 = vmul.f32 %v833, %v833
    %v847 = vmul.f32 %v834, %v834
    %v848 = vadd.f32 %v842, %v843
    %v849 = vadd.f32 %v848, %v844
    %v850 = vadd.f32 %v849, %v845
    %v851 = vadd.f32 %v850, %v846
    %v852 = vadd.f32 %v851, %v847
    %853 = vadd.xlane.f32.xlu0 %v852
    %v854 = vpop.xlane.xlu0 %853
    %v855 = vmul.f32 %v841, 0.001953125
    %v856 = vmul.f32 %v854, 0.001953125
    %v857 = vmul.f32 %v855, %v855
    %v858 = vsub.f32 %v856, %v857
    %v859 = vsub.f32 %v727, %v855
    %v860 = vsub.f32 %v747, %v855
    %v861 = vsub.f32 %v767, %v855
    %v862 = vsub.f32 %v787, %v855
    %v863 = vsub.f32 %v807, %v855
    %v864 = vsub.f32 %v827, %v855
    %v865 = vadd.f32 %v858, 1e-05
    %v866 = vrsqrt.pop %v865
    %v867 = vmul.f32 %v866, %v865
    %v868 = vmul.f32 %v867, %v866
    %v869 = vmul.f32 0.5, %v868
    %v870 = vsub.f32 1.5, %v869
    %v871 = vmul.f32 %v866, %v870
    %vm872 = vweird.f32 %v865
    %vm873 = vweird.f32 %v866
    %vm874 = vmor %vm872, %vm873
    %v875 = vsel %vm874, %v866, %v871
    %v876 = vmul.f32 %v859, %v875
    %v877 = vmul.f32 %v860, %v875
    %v878 = vmul.f32 %v861, %v875
    %v879 = vmul.f32 %v862, %v875
    %v880 = vmul.f32 %v863, %v875
    %v881 = vmul.f32 %v864, %v875
    %v882 = vmax.f32 %v876, 0.0
    %v883 = vmax.f32 %v877, 0.0
    %v884 = vmax.f32 %v878, 0.0
    %v885 = vmax.f32 %v879, 0.0
    %v886 = vmax.f32 %v880, 0.0
    %v887 = vmax.f32 %v881, 0.0
    %v888 = vmul.f32 %v882, %v430
    %v889 = vmul.f32 %v883, %v431
    %v890 = vmul.f32 %v884, %v432
    %v891 = vmul.f32 %v885, %v433
    %v892 = vmul.f32 %v886, %v434
    %v893 = vmul.f32 %v887, %v435
    %900 = vrot.lane.b32.xlu0 %v888, 110
    %v901 = vpop.permute.xlu0 %900
    %902 = vrot.lane.b32.xlu0 %v889, 110
    %v903 = vpop.permute.xlu0 %902
    %904 = vrot.lane.b32.xlu0 %v890, 110
    %v905 = vpop.permute.xlu0 %904
    %906 = vrot.lane.b32.xlu0 %v891, 110
    %v907 = vpop.permute.xlu0 %906
    %908 = vrot.lane.b32.xlu0 %v892, 110
    %v909 = vpop.permute.xlu0 %908
    %910 = vrot.lane.b32.xlu0 %v893, 110
    %v911 = vpop.permute.xlu0 %910
    %v912 = vsel %vm267, %v901, %v903
    %v913 = vsel %vm267, %v903, %v905
    %v914 = vsel %vm267, %v905, %v907
    %v915 = vsel %vm267, %v907, %v909
    %v916 = vsel %vm267, %v909, %v911
    %v923 = vsel %vm267, %v911, 0.0
    %v924 = vadd.f32 %v888, %v912
    %v925 = vadd.f32 %v889, %v913
    %v926 = vadd.f32 %v890, %v914
    %v927 = vadd.f32 %v891, %v915
    %v928 = vadd.f32 %v892, %v916
    %v929 = vadd.f32 %v893, %v923
    %936 = vrot.lane.b32.xlu0 %v924, 127
    %v937 = vpop.permute.xlu0 %936
    %938 = vrot.lane.b32.xlu0 %v925, 127
    %v939 = vpop.permute.xlu0 %938
    %940 = vrot.lane.b32.xlu0 %v926, 127
    %v941 = vpop.permute.xlu0 %940
    %942 = vrot.lane.b32.xlu0 %v927, 127
    %v943 = vpop.permute.xlu0 %942
    %944 = vrot.lane.b32.xlu0 %v928, 127
    %v945 = vpop.permute.xlu0 %944
    %946 = vrot.lane.b32.xlu0 %v929, 127
    %v947 = vpop.permute.xlu0 %946
    %v948 = vsel %vm217, %v937, %v939
    %v949 = vsel %vm217, %v939, %v941
    %v950 = vsel %vm217, %v941, %v943
    %v951 = vsel %vm217, %v943, %v945
    %v952 = vsel %vm217, %v945, %v947
    %v959 = vsel %vm217, %v947, 0.0
    %v960 = vadd.f32 %v924, %v948
    %v961 = vadd.f32 %v925, %v949
    %v962 = vadd.f32 %v926, %v950
    %v963 = vadd.f32 %v927, %v951
    %v964 = vadd.f32 %v928, %v952
    %v965 = vadd.f32 %v929, %v959
    %v966 = vmul.f32 %v960, 0.25
    %v967 = vmul.f32 %v961, 0.25
    %v968 = vmul.f32 %v962, 0.25
    %v969 = vmul.f32 %v963, 0.25
    %v970 = vmul.f32 %v964, 0.25
    %v971 = vmul.f32 %v965, 0.25
    %v972 = vld [vmem:[#allocation10] sm:$0xff]
    %v973 = vld [vmem:[#allocation10 + $0x8] sm:$0xff]
    %v974 = vld [vmem:[#allocation10 + $0x10] sm:$0xff]
    %v975 = vld [vmem:[#allocation10 + $0x18] sm:$0xff]
    %v976 = vld [vmem:[#allocation10 + $0x20] sm:$0xff]
    %v977 = vld [vmem:[#allocation10 + $0x28] sm:$0xff]
    %v978 = vld [vmem:[#allocation10 + $0x30] sm:$0xff]
    %v979 = vld [vmem:[#allocation10 + $0x38] sm:$0xff]
    %v980 = vld [vmem:[#allocation10 + $0x40] sm:$0xff]
    %v981 = vld [vmem:[#allocation10 + $0x48] sm:$0xff]
    %v982 = vld [vmem:[#allocation10 + $0x50] sm:$0xff]
    %v983 = vld [vmem:[#allocation10 + $0x58] sm:$0xff]
    %v984 = vld [vmem:[#allocation10 + $0x60] sm:$0xff]
    %v985 = vld [vmem:[#allocation10 + $0x68] sm:$0xff]
    %v986 = vld [vmem:[#allocation10 + $0x70] sm:$0xff]
    %v987 = vld [vmem:[#allocation10 + $0x78] sm:$0xff]
    %v988 = vld [vmem:[#allocation10 + $0x80] sm:$0xff]
    %v989 = vld [vmem:[#allocation10 + $0x88] sm:$0xff]
    %v990 = vld [vmem:[#allocation10 + $0x90] sm:$0xff]
    %v991 = vld [vmem:[#allocation10 + $0x98] sm:$0xff]
    %v992 = vld [vmem:[#allocation10 + $0xa0] sm:$0xff]
    %v993 = vld [vmem:[#allocation10 + $0xa8] sm:$0xff]
    %v994 = vld [vmem:[#allocation10 + $0xb0] sm:$0xff]
    %v995 = vld [vmem:[#allocation10 + $0xb8] sm:$0xff]
    %v996 = vld [vmem:[#allocation10 + $0xc0] sm:$0xff]
    %v997 = vld [vmem:[#allocation10 + $0xc8] sm:$0xff]
    %v998 = vld [vmem:[#allocation10 + $0xd0] sm:$0xff]
    %v999 = vld [vmem:[#allocation10 + $0xd8] sm:$0xff]
    %v1000 = vld [vmem:[#allocation10 + $0xe0] sm:$0xff]
    %v1001 = vld [vmem:[#allocation10 + $0xe8] sm:$0xff]
    %v1002 = vld [vmem:[#allocation10 + $0xf0] sm:$0xff]
    %v1003 = vld [vmem:[#allocation10 + $0xf8] sm:$0xff]
    %v1004 = vld [vmem:[#allocation10 + $0x100] sm:$0xff]
    %v1005 = vld [vmem:[#allocation10 + $0x108] sm:$0xff]
    %v1006 = vld [vmem:[#allocation10 + $0x110] sm:$0xff]
    %v1007 = vld [vmem:[#allocation10 + $0x118] sm:$0xff]
    %v1008 = vld [vmem:[#allocation10 + $0x120] sm:$0xff]
    %v1009 = vld [vmem:[#allocation10 + $0x128] sm:$0xff]
    %v1010 = vld [vmem:[#allocation10 + $0x130] sm:$0xff]
    %v1011 = vld [vmem:[#allocation10 + $0x138] sm:$0xff]
    %v1012 = vld [vmem:[#allocation10 + $0x140] sm:$0xff]
    %v1013 = vld [vmem:[#allocation10 + $0x148] sm:$0xff]
    %v1014 = vld [vmem:[#allocation10 + $0x150] sm:$0xff]
    %v1015 = vld [vmem:[#allocation10 + $0x158] sm:$0xff]
    %v1016 = vld [vmem:[#allocation10 + $0x160] sm:$0xff]
    %v1017 = vld [vmem:[#allocation10 + $0x168] sm:$0xff]
    %v1018 = vld [vmem:[#allocation10 + $0x170] sm:$0xff]
    %v1019 = vld [vmem:[#allocation10 + $0x178] sm:$0xff]
    %v1020 = vld [vmem:[#allocation10 + $0x180] sm:$0xff]
    %v1021 = vld [vmem:[#allocation10 + $0x188] sm:$0xff]
    %v1022 = vld [vmem:[#allocation10 + $0x190] sm:$0xff]
    %v1023 = vld [vmem:[#allocation10 + $0x198] sm:$0xff]
    %v1024 = vld [vmem:[#allocation10 + $0x1a0] sm:$0xff]
    %v1025 = vld [vmem:[#allocation10 + $0x1a8] sm:$0xff]
    %v1026 = vld [vmem:[#allocation10 + $0x1b0] sm:$0xff]
    %v1027 = vld [vmem:[#allocation10 + $0x1b8] sm:$0xff]
    %v1028 = vld [vmem:[#allocation10 + $0x1c0] sm:$0xff]
    %v1029 = vld [vmem:[#allocation10 + $0x1c8] sm:$0xff]
    %v1030 = vld [vmem:[#allocation10 + $0x1d0] sm:$0xff]
    %v1031 = vld [vmem:[#allocation10 + $0x1d8] sm:$0xff]
    %v1032 = vld [vmem:[#allocation10 + $0x1e0] sm:$0xff]
    %v1033 = vld [vmem:[#allocation10 + $0x1e8] sm:$0xff]
    %v1034 = vld [vmem:[#allocation10 + $0x1f0] sm:$0xff]
    %v1035 = vld [vmem:[#allocation10 + $0x1f8] sm:$0xff]
    %v1036 = vld [vmem:[#allocation10 + $0x200] sm:$0xff]
    %v1037 = vld [vmem:[#allocation10 + $0x208] sm:$0xff]
    %v1038 = vld [vmem:[#allocation10 + $0x210] sm:$0xff]
    %v1039 = vld [vmem:[#allocation10 + $0x218] sm:$0xff]
    %v1040 = vld [vmem:[#allocation10 + $0x220] sm:$0xff]
    %v1041 = vld [vmem:[#allocation10 + $0x228] sm:$0xff]
    %v1042 = vld [vmem:[#allocation10 + $0x230] sm:$0xff]
    %v1043 = vld [vmem:[#allocation10 + $0x238] sm:$0xff]
    %v1044 = vld [vmem:[#allocation10 + $0x240] sm:$0xff]
    %v1045 = vld [vmem:[#allocation10 + $0x248] sm:$0xff]
    %v1046 = vld [vmem:[#allocation10 + $0x250] sm:$0xff]
    %v1047 = vld [vmem:[#allocation10 + $0x258] sm:$0xff]
    %v1048 = vld [vmem:[#allocation10 + $0x260] sm:$0xff]
    %v1049 = vld [vmem:[#allocation10 + $0x268] sm:$0xff]
    %v1050 = vld [vmem:[#allocation10 + $0x270] sm:$0xff]
    %v1051 = vld [vmem:[#allocation10 + $0x278] sm:$0xff]
    %v1052 = vld [vmem:[#allocation10 + $0x280] sm:$0xff]
    %v1053 = vld [vmem:[#allocation10 + $0x288] sm:$0xff]
    %v1054 = vld [vmem:[#allocation10 + $0x290] sm:$0xff]
    %v1055 = vld [vmem:[#allocation10 + $0x298] sm:$0xff]
    %v1056 = vld [vmem:[#allocation10 + $0x2a0] sm:$0xff]
    %v1057 = vld [vmem:[#allocation10 + $0x2a8] sm:$0xff]
    %v1058 = vld [vmem:[#allocation10 + $0x2b0] sm:$0xff]
    %v1059 = vld [vmem:[#allocation10 + $0x2b8] sm:$0xff]
    %v1060 = vld [vmem:[#allocation10 + $0x2c0] sm:$0xff]
    %v1061 = vld [vmem:[#allocation10 + $0x2c8] sm:$0xff]
    %v1062 = vld [vmem:[#allocation10 + $0x2d0] sm:$0xff]
    %v1063 = vld [vmem:[#allocation10 + $0x2d8] sm:$0xff]
    %v1064 = vld [vmem:[#allocation10 + $0x2e0] sm:$0xff]
    %v1065 = vld [vmem:[#allocation10 + $0x2e8] sm:$0xff]
    %v1066 = vld [vmem:[#allocation10 + $0x2f0] sm:$0xff]
    %v1067 = vld [vmem:[#allocation10 + $0x2f8] sm:$0xff]
    %1068 = vmatpush.msra.mxu0 %v987
    %1069 = vmatpush.msra.mxu0 %v986
    %1070 = vmatpush.msra.mxu0 %v985
    %1071 = vmatpush.msra.mxu0 %v984
    %1072 = vmatpush.msra.mxu0 %v983
    %1073 = vmatpush.msra.mxu0 %v982
    %1074 = vmatpush.msra.mxu0 %v981
    %1075 = vmatpush.msra.mxu0 %v980
    %1076 = vmatpush.msra.mxu0 %v979
    %1077 = vmatpush.msra.mxu0 %v978
    %1078 = vmatpush.msra.mxu0 %v977
    %1079 = vmatpush.msra.mxu0 %v976
    %1080 = vmatpush.msra.mxu0 %v975
    %1081 = vmatpush.msra.mxu0 %v974
    %1082 = vmatpush.msra.mxu0 %v973
    %1083 = vmatpush.msra.mxu0 %v972
    %1084 = vmatmul.f32.gmra.mxu0 %v966
    %v1085 = vpop.f32.mrf.mxu0
    %v1086 = vadd.f32 0.0, %v1085
    %1087 = vdwg.mxu0
    %1088 = vmatpush.msra.mxu0 %v1003
    %1089 = vmatpush.msra.mxu0 %v1002
    %1090 = vmatpush.msra.mxu0 %v1001
    %1091 = vmatpush.msra.mxu0 %v1000
    %1092 = vmatpush.msra.mxu0 %v999
    %1093 = vmatpush.msra.mxu0 %v998
    %1094 = vmatpush.msra.mxu0 %v997
    %1095 = vmatpush.msra.mxu0 %v996
    %1096 = vmatpush.msra.mxu0 %v995
    %1097 = vmatpush.msra.mxu0 %v994
    %1098 = vmatpush.msra.mxu0 %v993
    %1099 = vmatpush.msra.mxu0 %v992
    %1100 = vmatpush.msra.mxu0 %v991
    %1101 = vmatpush.msra.mxu0 %v990
    %1102 = vmatpush.msra.mxu0 %v989
    %1103 = vmatpush.msra.mxu0 %v988
    %1104 = vmatmul.f32.gmra.mxu0 %v967
    %v1105 = vpop.f32.mrf.mxu0
    %v1106 = vadd.f32 %v1086, %v1105
    %1107 = vdwg.mxu0
    %1108 = vmatpush.msra.mxu0 %v1019
    %1109 = vmatpush.msra.mxu0 %v1018
    %1110 = vmatpush.msra.mxu0 %v1017
    %1111 = vmatpush.msra.mxu0 %v1016
    %1112 = vmatpush.msra.mxu0 %v1015
    %1113 = vmatpush.msra.mxu0 %v1014
    %1114 = vmatpush.msra.mxu0 %v1013
    %1115 = vmatpush.msra.mxu0 %v1012
    %1116 = vmatpush.msra.mxu0 %v1011
    %1117 = vmatpush.msra.mxu0 %v1010
    %1118 = vmatpush.msra.mxu0 %v1009
    %1119 = vmatpush.msra.mxu0 %v1008
    %1120 = vmatpush.msra.mxu0 %v1007
    %1121 = vmatpush.msra.mxu0 %v1006
    %1122 = vmatpush.msra.mxu0 %v1005
    %1123 = vmatpush.msra.mxu0 %v1004
    %1124 = vmatmul.f32.gmra.mxu0 %v968
    %v1125 = vpop.f32.mrf.mxu0
    %v1126 = vadd.f32 %v1106, %v1125
    %1127 = vdwg.mxu0
    %1128 = vmatpush.msra.mxu0 %v1035
    %1129 = vmatpush.msra.mxu0 %v1034
    %1130 = vmatpush.msra.mxu0 %v1033
    %1131 = vmatpush.msra.mxu0 %v1032
    %1132 = vmatpush.msra.mxu0 %v1031
    %1133 = vmatpush.msra.mxu0 %v1030
    %1134 = vmatpush.msra.mxu0 %v1029
    %1135 = vmatpush.msra.mxu0 %v1028
    %1136 = vmatpush.msra.mxu0 %v1027
    %1137 = vmatpush.msra.mxu0 %v1026
    %1138 = vmatpush.msra.mxu0 %v1025
    %1139 = vmatpush.msra.mxu0 %v1024
    %1140 = vmatpush.msra.mxu0 %v1023
    %1141 = vmatpush.msra.mxu0 %v1022
    %1142 = vmatpush.msra.mxu0 %v1021
    %1143 = vmatpush.msra.mxu0 %v1020
    %1144 = vmatmul.f32.gmra.mxu0 %v969
    %v1145 = vpop.f32.mrf.mxu0
    %v1146 = vadd.f32 %v1126, %v1145
    %1147 = vdwg.mxu0
    %1148 = vmatpush.msra.mxu0 %v1051
    %1149 = vmatpush.msra.mxu0 %v1050
    %1150 = vmatpush.msra.mxu0 %v1049
    %1151 = vmatpush.msra.mxu0 %v1048
    %1152 = vmatpush.msra.mxu0 %v1047
    %1153 = vmatpush.msra.mxu0 %v1046
    %1154 = vmatpush.msra.mxu0 %v1045
    %1155 = vmatpush.msra.mxu0 %v1044
    %1156 = vmatpush.msra.mxu0 %v1043
    %1157 = vmatpush.msra.mxu0 %v1042
    %1158 = vmatpush.msra.mxu0 %v1041
    %1159 = vmatpush.msra.mxu0 %v1040
    %1160 = vmatpush.msra.mxu0 %v1039
    %1161 = vmatpush.msra.mxu0 %v1038
    %1162 = vmatpush.msra.mxu0 %v1037
    %1163 = vmatpush.msra.mxu0 %v1036
    %1164 = vmatmul.f32.gmra.mxu0 %v970
    %v1165 = vpop.f32.mrf.mxu0
    %v1166 = vadd.f32 %v1146, %v1165
    %1167 = vdwg.mxu0
    %1168 = vmatpush.msra.mxu0 %v1067
    %1169 = vmatpush.msra.mxu0 %v1066
    %1170 = vmatpush.msra.mxu0 %v1065
    %1171 = vmatpush.msra.mxu0 %v1064
    %1172 = vmatpush.msra.mxu0 %v1063
    %1173 = vmatpush.msra.mxu0 %v1062
    %1174 = vmatpush.msra.mxu0 %v1061
    %1175 = vmatpush.msra.mxu0 %v1060
    %1176 = vmatpush.msra.mxu0 %v1059
    %1177 = vmatpush.msra.mxu0 %v1058
    %1178 = vmatpush.msra.mxu0 %v1057
    %1179 = vmatpush.msra.mxu0 %v1056
    %1180 = vmatpush.msra.mxu0 %v1055
    %1181 = vmatpush.msra.mxu0 %v1054
    %1182 = vmatpush.msra.mxu0 %v1053
    %1183 = vmatpush.msra.mxu0 %v1052
    %1184 = vmatmul.f32.gmra.mxu0 %v971
    %v1185 = vpop.f32.mrf.mxu0
    %v1186 = vadd.f32 %v1166, %v1185
    %1187 = vdwg.mxu0
    %1188 = vst [vmem:[#allocation11] sm:$0xff] %v1186
    // Predicated region
    $region42: #{tpu_custom_call.1} parent=1 // pred_check
      _
    $region43: #{tpu_custom_call.1} parent=1 // pred_check_branch
      %1190 = sbr.rel (0) target = $region45
    $region44: #{tpu_custom_call.1} parent=1 // pred_region
      %1192 = vsyncadd [#allocation4], 0
      %s1194 = sshll.u32 [#allocation11], 4
      %s1195 = int_to_ptr.vmem [resolvable:$true] %s1194
      %s1196 = sshll.u32 %s5, 4
      %s1197 = int_to_ptr.hbm [resolvable:$true] %s1196
      %1199 = dma.vmem_to_hbm [thread:$0]  %s1195, 128, %s1197, [#allocation4]
    $region45: #{tpu_custom_call.1} parent=1 // pred_fallthru
      _
    // Predicated region
    $region46: #{tpu_custom_call.1} parent=1 // pred_check
      _
    $region47: #{tpu_custom_call.1} parent=1 // pred_check_branch
      %1201 = sbr.rel (0) target = $region49
    $region48: #{tpu_custom_call.1} parent=1 // pred_region
      %1203 = dma.done [#allocation4], 128
    $region49: #{tpu_custom_call.1} parent=1 // pred_fallthru
      _
    %1204 = vsyncpa [#allocation3], 1
    %1205 = vsyncpa [#allocation6], 1
    %1206 = vsyncpa [#allocation9], 1
    %1207 = vsyncpa [#allocation4], 1

</llo_original>
